<compile_context>
chip_gen: v7x
topology: tpu7x:2x2x1
jax: 0.10.0
libtpu: 0.0.40
codegen_flags: <defaults>
</compile_context>

<pallas_src>
import jax
import jax.numpy as jnp
from jax.experimental import pallas as pl
from jax.experimental.pallas import tpu as pltpu

_SUBLANE = 8                 # batch tiles are multiples of the sublane width
_VMEM_BUDGET = 12 << 20      # conservative: fits v5e's 16 MiB default scoped VMEM


def _round_up(x, m):
    return ((x + m - 1) // m) * m


def _mlp_kernel(y_ref, w1_ref, b1_ref, w2_ref, b2_ref, o_ref):
    # hidden = tanh(y @ W1 + b1)   -- MXU matmul (f32 accum) + VPU/EUP elementwise
    h = jnp.dot(y_ref[...], w1_ref[...], preferred_element_type=jnp.float32)
    h = jnp.tanh(h + b1_ref[...])               # f32 tanh (v5e has no bf16 VPU/EUP)
    # out = h @ W2 + b2
    # NOTE: h.astype(w2 dtype) is exact for f32 weights; tiny precision loss if bf16
    # weights are ever passed (f32 accumulation is still used for the matmul itself).
    o = jnp.dot(h.astype(w2_ref.dtype), w2_ref[...],
                preferred_element_type=jnp.float32) + b2_ref[...]
    o_ref[...] = o.astype(o_ref.dtype)


def _choose_tile_b(B, n_in, n_hid, n_out, itemsize, requested):
    """Clamp the batch tile to a VMEM budget (double-buffered streams + f32 temps)."""
    per_row = (2 * (n_in + n_out)) * itemsize + (n_hid + n_out) * 4
    cap = max(_SUBLANE, (_VMEM_BUDGET // max(per_row, 1)) // _SUBLANE * _SUBLANE)
    tb = min(int(requested), cap, _round_up(B, _SUBLANE))
    return max(_SUBLANE, _round_up(tb, _SUBLANE))


def tanh_func_forward(t, y, w1, b1, w2, b2, *, tile_b=1024, tiny_batch=1024):
    """Pallas equivalent of TanhFunc.forward(t, y). `t` is unused (as in PyTorch).

    w1: [n_input, n_hidden], b1: [1, n_hidden], w2: [n_hidden, n_output],
    b2: [1, n_output]  (weights stored pre-transposed so the kernel computes y @ W).
    No padding of feature dims is needed: every block's last dim either equals the
    full array dim or is handled as a full-array resident block.
    """
    del t  # forward ignores t
    B, n_in = y.shape
    n_hid = w1.shape[1]
    n_out = w2.shape[1]

    if B <= tiny_batch:
        # Tiny-shape path: no grid at all — whole arrays as single VMEM blocks,
        # no grid-step bookkeeping (ODE RHS calls are usually in this regime).
        return pl.pallas_call(
            _mlp_kernel,
            out_shape=jax.ShapeDtypeStruct((B, n_out), y.dtype),
        )(y, w1, b1, w2, b2)

    # Batch-streaming path: tile only over B; weights/biases stay VMEM-resident
    # (same block index for every grid step), activations are double-buffered.
    tile_b = _choose_tile_b(B, n_in, n_hid, n_out, y.dtype.itemsize, tile_b)
    B_p = _round_up(B, tile_b)            # pad batch only, so the grid divides evenly
    y_p = jnp.pad(y, ((0, B_p - B), (0, 0))) if B_p != B else y
    n_tiles = B_p // tile_b

    out_p = pl.pallas_call(
        _mlp_kernel,
        out_shape=jax.ShapeDtypeStruct((B_p, n_out), y.dtype),
        grid=(n_tiles,),
        in_specs=[
            pl.BlockSpec((tile_b, n_in), lambda i: (i, 0)),   # y stream (true width)
            pl.BlockSpec(w1.shape, lambda i: (0, 0)),          # resident
            pl.BlockSpec(b1.shape, lambda i: (0, 0)),          # resident
            pl.BlockSpec(w2.shape, lambda i: (0, 0)),          # resident
            pl.BlockSpec(b2.shape, lambda i: (0, 0)),          # resident
        ],
        out_specs=pl.BlockSpec((tile_b, n_out), lambda i: (i, 0)),  # true width
        compiler_params=pltpu.CompilerParams(
            dimension_semantics=("parallel",)),                 # v7x: 2 TCs share tiles
    )(y_p, w1, b1, w2, b2)

    return out_p[:B]                       # batch slice only; no column slice needed


def init_params(key, n_input, n_hidden, n_output, dtype=jnp.float32):
    """Match nn.init.normal_(w, 0, 0.1) / bias=0. Weights stored as [in, out]."""
    k1, k2 = jax.random.split(key)
    w1 = (0.1 * jax.random.normal(k1, (n_input, n_hidden))).astype(dtype)
    b1 = jnp.zeros((1, n_hidden), dtype)
    w2 = (0.1 * jax.random.normal(k2, (n_hidden, n_output))).astype(dtype)
    b2 = jnp.zeros((1, n_output), dtype)
    return w1, b1, w2, b2


if __name__ == "__main__":
    key = jax.random.PRNGKey(0)
    n_input, n_hidden, n_output = 32, 64, 32

    kp, ky1, ky2 = jax.random.split(key, 3)
    w1, b1, w2, b2 = init_params(kp, n_input, n_hidden, n_output)
    t = jnp.float32(0.0)  # unused, mirrors the PyTorch signature

    # --- tiny-shape path (no grid) ---
    batch = 8
    y = jax.random.normal(ky1, (batch, n_input), jnp.float32)
    out = jax.block_until_ready(tanh_func_forward(t, y, w1, b1, w2, b2))
    ref = jnp.tanh(y @ w1 + b1) @ w2 + b2
    assert out.shape == (batch, n_output)
    assert jnp.allclose(out, ref, atol=1e-5, rtol=1e-5)

    # --- batch-streaming path (grid over B, weights VMEM-resident) ---
    batch2 = 300  # non-multiple of tile to exercise batch padding + slicing
    y2 = jax.random.normal(ky2, (batch2, n_input), jnp.float32)
    out2 = jax.block_until_ready(
        tanh_func_forward(t, y2, w1, b1, w2, b2, tile_b=128, tiny_batch=64))
    ref2 = jnp.tanh(y2 @ w1 + b1) @ w2 + b2
    assert out2.shape == (batch2, n_output)
    assert jnp.allclose(out2, ref2, atol=1e-5, rtol=1e-5)

    print("KERNEL_OK")
</pallas_src>

<mosaic_0001>
module attributes {stable_mosaic.version = 11 : i64} {
  func.func @_mlp_kernel(%arg0: memref<8x32xf32, #tpu.memory_space<vmem>>, %arg1: memref<32x64xf32, #tpu.memory_space<vmem>>, %arg2: memref<1x64xf32, #tpu.memory_space<vmem>>, %arg3: memref<64x32xf32, #tpu.memory_space<vmem>>, %arg4: memref<1x32xf32, #tpu.memory_space<vmem>>, %arg5: memref<8x32xf32, #tpu.memory_space<vmem>>) attributes {dimension_semantics = [], scalar_prefetch = 0 : i64, scratch_operands = 0 : i64, tpu.core_type = #tpu.core_type<tc>} {
    %c0 = arith.constant 0 : index
    %c0_0 = arith.constant 0 : index
    %0 = vector.load %arg0[%c0, %c0_0] : memref<8x32xf32, #tpu.memory_space<vmem>>, vector<8x32xf32>
    %c0_1 = arith.constant 0 : index
    %c0_2 = arith.constant 0 : index
    %1 = vector.load %arg1[%c0_1, %c0_2] : memref<32x64xf32, #tpu.memory_space<vmem>>, vector<32x64xf32>
    %cst = arith.constant dense<0.000000e+00> : vector<8x64xf32>
    %2 = tpu.matmul %0, %1, %cst {dimension_numbers = #tpu.dot_dimension_numbers<[1], [0], [0], [1], [0, 0, 1, 1], [], []>} : vector<8x32xf32>, vector<32x64xf32>, vector<8x64xf32> -> vector<8x64xf32>
    %c0_3 = arith.constant 0 : index
    %c0_4 = arith.constant 0 : index
    %3 = vector.load %arg2[%c0_3, %c0_4] : memref<1x64xf32, #tpu.memory_space<vmem>>, vector<1x64xf32>
    %4 = vector.broadcast %3 : vector<1x64xf32> to vector<8x64xf32>
    %5 = arith.addf %2, %4 : vector<8x64xf32>
    %6 = math.tanh %5 : vector<8x64xf32>
    %c0_5 = arith.constant 0 : index
    %c0_6 = arith.constant 0 : index
    %7 = vector.load %arg3[%c0_5, %c0_6] : memref<64x32xf32, #tpu.memory_space<vmem>>, vector<64x32xf32>
    %cst_7 = arith.constant dense<0.000000e+00> : vector<8x32xf32>
    %8 = tpu.matmul %6, %7, %cst_7 {dimension_numbers = #tpu.dot_dimension_numbers<[1], [0], [0], [1], [0, 0, 1, 1], [], []>} : vector<8x64xf32>, vector<64x32xf32>, vector<8x32xf32> -> vector<8x32xf32>
    %c0_8 = arith.constant 0 : index
    %c0_9 = arith.constant 0 : index
    %9 = vector.load %arg4[%c0_8, %c0_9] : memref<1x32xf32, #tpu.memory_space<vmem>>, vector<1x32xf32>
    %10 = vector.broadcast %9 : vector<1x32xf32> to vector<8x32xf32>
    %11 = arith.addf %8, %10 : vector<8x32xf32>
    %c0_10 = arith.constant 0 : index
    %c0_11 = arith.constant 0 : index
    %12 = vector.load %arg5[%c0_10, %c0_11] : memref<8x32xf32, #tpu.memory_space<vmem>>, vector<8x32xf32>
    tpu.vector_store %arg5[%c0_10, %c0_11], %11 {strides = array<i32>} : memref<8x32xf32, #tpu.memory_space<vmem>>, vector<8x32xf32>,
    return
  }
}

</mosaic_0001>

<llo_original>
// kernel: tpu_custom_call.1
$region0: #{tpu_custom_call.1}
  #allocation0 [shape = 'u32[]', space=smem, size = 0x4, offset = 0x4, fixed_abs, tag = 'smem constant byte address 0x4 - core index']
  #allocation1 [shape = 'u32[144,128]{1,0:T(1,128)}', space=vmem, size = 0x12000, scoped, tag = 'internal scratch']
  %s0 = inlined_call_operand.vmem [shape: f32[8,32], index: 0, kind: input, shape index: {}]
  %s1 = inlined_call_operand.vmem [shape: f32[32,64], index: 1, kind: input, shape index: {}]
  %s2 = inlined_call_operand.vmem [shape: f32[1,64], index: 2, kind: input, shape index: {}]
  %s3 = inlined_call_operand.vmem [shape: f32[64,32], index: 3, kind: input, shape index: {}]
  %s4 = inlined_call_operand.vmem [shape: f32[1,32], index: 4, kind: input, shape index: {}]
  %s5 = inlined_call_operand.hbm [shape: f32[8,32], index: 5, kind: output, shape index: {}]
  %s6 = sld [smem:[#allocation0]]
  $region30: #{tpu_custom_call.1} parent=0
    _
  %s8 = ssub.s32 1, %s6
  %s9 = scalar_select 0, %s8, %s6
  $region1: #{tpu_custom_call.1} parent=0
    #allocation2 [shape = 'u8[4096]{0}', space=vmem, size = 0x1000, scoped, tag = 'output window, operand 0, single buffered']
    #allocation3 [shape = 's32[1]{0}', space=sflag, size = 0x4, scoped, tag = 'scoped memory for tpu_custom_call.1']
    %10 = vsyncpa [#allocation3], 0
    // Predicated region
    $region2: #{tpu_custom_call.1} parent=1 // pred_check
      _
    $region3: #{tpu_custom_call.1} parent=1 // pred_check_branch
      %12 = sbr.rel (0) target = $region5
    $region4: #{tpu_custom_call.1} parent=1 // pred_region
      _
    $region5: #{tpu_custom_call.1} parent=1 // pred_fallthru
      _
    // Predicated region
    $region6: #{tpu_custom_call.1} parent=1 // pred_check
      _
    $region7: #{tpu_custom_call.1} parent=1 // pred_check_branch
      %14 = sbr.rel (0) target = $region9
    $region8: #{tpu_custom_call.1} parent=1 // pred_region
      _
    $region9: #{tpu_custom_call.1} parent=1 // pred_fallthru
      _
    // Predicated region
    $region10: #{tpu_custom_call.1} parent=1 // pred_check
      _
    $region11: #{tpu_custom_call.1} parent=1 // pred_check_branch
      %16 = sbr.rel (0) target = $region13
    $region12: #{tpu_custom_call.1} parent=1 // pred_region
      _
    $region13: #{tpu_custom_call.1} parent=1 // pred_fallthru
      _
    // Predicated region
    $region14: #{tpu_custom_call.1} parent=1 // pred_check
      _
    $region15: #{tpu_custom_call.1} parent=1 // pred_check_branch
      %18 = sbr.rel (0) target = $region17
    $region16: #{tpu_custom_call.1} parent=1 // pred_region
      _
    $region17: #{tpu_custom_call.1} parent=1 // pred_fallthru
      _
    // Predicated region
    $region18: #{tpu_custom_call.1} parent=1 // pred_check
      _
    $region19: #{tpu_custom_call.1} parent=1 // pred_check_branch
      %20 = sbr.rel (0) target = $region21
    $region20: #{tpu_custom_call.1} parent=1 // pred_region
      _
    $region21: #{tpu_custom_call.1} parent=1 // pred_fallthru
      _
    %v21 = vld [vmem:[%s0] sm:$0xff]
    %v22 = vld [vmem:[%s1] sm:$0xff]
    %v23 = vld [vmem:[%s1 + $0x8] sm:$0xff]
    %v24 = vld [vmem:[%s1 + $0x10] sm:$0xff]
    %v25 = vld [vmem:[%s1 + $0x18] sm:$0xff]
    %v26 = vld [vmem:[%s2] sm:$0x1]
    %v28 = vlaneseq
    %v29 = vshrl.u32 %v28, 7
    %v30 = vsub.s32 0, %v29
    %v31 = vrot.slane %v26, %v30
    %vm33 = vcmask 261120
    %v35 = vsel %vm33, %v21, 0
    %37 = vmatprep.subr.mxu0 0.0
    %38 = vmatpush1.msra.mxu0 %v22
    %39 = vmatprep.subr.mxu0 0.0
    %40 = vmatpush1.msra.mxu0 %v23
    %41 = vmatprep.subr.mxu0 0.0
    %42 = vmatpush1.msra.mxu0 %v24
    %43 = vmatprep.subr.mxu0 0.0
    %44 = vmatpush1.msra.mxu0 %v25
    %45 = vmatprep.subr.mxu0 0.0
    %46 = vmatpush1.msra.mxu0 0.0
    %47 = vmatprep.subr.mxu0 0.0
    %48 = vmatpush1.msra.mxu0 0.0
    %49 = vmatprep.subr.mxu0 0.0
    %50 = vmatpush1.msra.mxu0 0.0
    %51 = vmatprep.subr.mxu0 0.0
    %52 = vmatpush1.msra.mxu0 0.0
    %53 = vmatprep.subr.mxu0 0.0
    %54 = vmatpush1.msra.mxu0 0.0
    %55 = vmatprep.subr.mxu0 0.0
    %56 = vmatpush1.msra.mxu0 0.0
    %57 = vmatprep.subr.mxu0 0.0
    %58 = vmatpush1.msra.mxu0 0.0
    %59 = vmatprep.subr.mxu0 0.0
    %60 = vmatpush1.msra.mxu0 0.0
    %61 = vmatprep.subr.mxu0 0.0
    %62 = vmatpush1.msra.mxu0 0.0
    %63 = vmatprep.subr.mxu0 0.0
    %64 = vmatpush1.msra.mxu0 0.0
    %65 = vmatprep.subr.mxu0 0.0
    %66 = vmatpush1.msra.mxu0 0.0
    %67 = vmatprep.subr.mxu0 0.0
    %68 = vmatpush1.msra.mxu0 0.0
    %69 = vmatprep.subr.mxu0 0.0
    %70 = vmatpush1.msra.mxu0 0.0
    %71 = vmatprep.subr.mxu0 0.0
    %72 = vmatpush1.msra.mxu0 0.0
    %73 = vmatprep.subr.mxu0 0.0
    %74 = vmatpush1.msra.mxu0 0.0
    %75 = vmatprep.subr.mxu0 0.0
    %76 = vmatpush1.msra.mxu0 0.0
    %77 = vmatprep.subr.mxu0 0.0
    %78 = vmatpush1.msra.mxu0 0.0
    %79 = vmatprep.subr.mxu0 0.0
    %80 = vmatpush1.msra.mxu0 0.0
    %81 = vmatprep.subr.mxu0 0.0
    %82 = vmatpush1.msra.mxu0 0.0
    %83 = vmatprep.subr.mxu0 0.0
    %84 = vmatpush1.msra.mxu0 0.0
    %85 = vmatprep.subr.mxu0 0.0
    %86 = vmatpush1.msra.mxu0 0.0
    %87 = vmatprep.subr.mxu0 0.0
    %88 = vmatpush1.msra.mxu0 0.0
    %89 = vmatprep.subr.mxu0 0.0
    %90 = vmatpush1.msra.mxu0 0.0
    %91 = vmatprep.subr.mxu0 0.0
    %92 = vmatpush1.msra.mxu0 0.0
    %93 = vmatprep.subr.mxu0 0.0
    %94 = vmatpush1.msra.mxu0 0.0
    %95 = vmatprep.subr.mxu0 0.0
    %96 = vmatpush1.msra.mxu0 0.0
    %97 = vmatprep.subr.mxu0 0.0
    %98 = vmatpush1.msra.mxu0 0.0
    %99 = vmatprep.subr.mxu0 0.0
    %100 = vmatpush1.msra.mxu0 0.0
    %101 = vmatprep.mubr.f32.mxu0 0.0
    %102 = vmatmul.mubr.f32.gmra.mrb[0].mxu0 %v35
    %v103 = vpop.f32.mrb[0].mxu0
    %v104 = vadd.f32 %v31, %v103
    %v105 = vpop.f32.mrb[0].mxu0
    %106 = vdwg.mxu0
    %v107 = vtanh.pop %v104
    %v108 = vld [vmem:[%s3] sm:$0xff]
    %v109 = vld [vmem:[%s3 + $0x8] sm:$0xff]
    %v110 = vld [vmem:[%s3 + $0x10] sm:$0xff]
    %v111 = vld [vmem:[%s3 + $0x18] sm:$0xff]
    %v112 = vld [vmem:[%s3 + $0x20] sm:$0xff]
    %v113 = vld [vmem:[%s3 + $0x28] sm:$0xff]
    %v114 = vld [vmem:[%s3 + $0x30] sm:$0xff]
    %v115 = vld [vmem:[%s3 + $0x38] sm:$0xff]
    %v116 = vld [vmem:[%s4] sm:$0x1]
    %v118 = vlaneseq
    %v119 = vshrl.u32 %v118, 7
    %v120 = vsub.s32 0, %v119
    %v121 = vrot.slane %v116, %v120
    %vm123 = vcmask 523264
    %v125 = vsel %vm123, %v107, 0
    %127 = vmatprep.subr.mxu0 0.0
    %128 = vmatpush1.msra.mxu0 %v108
    %129 = vmatprep.subr.mxu0 0.0
    %130 = vmatpush1.msra.mxu0 %v109
    %131 = vmatprep.subr.mxu0 0.0
    %132 = vmatpush1.msra.mxu0 %v110
    %133 = vmatprep.subr.mxu0 0.0
    %134 = vmatpush1.msra.mxu0 %v111
    %135 = vmatprep.subr.mxu0 0.0
    %136 = vmatpush1.msra.mxu0 %v112
    %137 = vmatprep.subr.mxu0 0.0
    %138 = vmatpush1.msra.mxu0 %v113
    %139 = vmatprep.subr.mxu0 0.0
    %140 = vmatpush1.msra.mxu0 %v114
    %141 = vmatprep.subr.mxu0 0.0
    %142 = vmatpush1.msra.mxu0 %v115
    %143 = vmatprep.subr.mxu0 0.0
    %144 = vmatpush1.msra.mxu0 0.0
    %145 = vmatprep.subr.mxu0 0.0
    %146 = vmatpush1.msra.mxu0 0.0
    %147 = vmatprep.subr.mxu0 0.0
    %148 = vmatpush1.msra.mxu0 0.0
    %149 = vmatprep.subr.mxu0 0.0
    %150 = vmatpush1.msra.mxu0 0.0
    %151 = vmatprep.subr.mxu0 0.0
    %152 = vmatpush1.msra.mxu0 0.0
    %153 = vmatprep.subr.mxu0 0.0
    %154 = vmatpush1.msra.mxu0 0.0
    %155 = vmatprep.subr.mxu0 0.0
    %156 = vmatpush1.msra.mxu0 0.0
    %157 = vmatprep.subr.mxu0 0.0
    %158 = vmatpush1.msra.mxu0 0.0
    %159 = vmatprep.subr.mxu0 0.0
    %160 = vmatpush1.msra.mxu0 0.0
    %161 = vmatprep.subr.mxu0 0.0
    %162 = vmatpush1.msra.mxu0 0.0
    %163 = vmatprep.subr.mxu0 0.0
    %164 = vmatpush1.msra.mxu0 0.0
    %165 = vmatprep.subr.mxu0 0.0
    %166 = vmatpush1.msra.mxu0 0.0
    %167 = vmatprep.subr.mxu0 0.0
    %168 = vmatpush1.msra.mxu0 0.0
    %169 = vmatprep.subr.mxu0 0.0
    %170 = vmatpush1.msra.mxu0 0.0
    %171 = vmatprep.subr.mxu0 0.0
    %172 = vmatpush1.msra.mxu0 0.0
    %173 = vmatprep.subr.mxu0 0.0
    %174 = vmatpush1.msra.mxu0 0.0
    %175 = vmatprep.subr.mxu0 0.0
    %176 = vmatpush1.msra.mxu0 0.0
    %177 = vmatprep.subr.mxu0 0.0
    %178 = vmatpush1.msra.mxu0 0.0
    %179 = vmatprep.subr.mxu0 0.0
    %180 = vmatpush1.msra.mxu0 0.0
    %181 = vmatprep.subr.mxu0 0.0
    %182 = vmatpush1.msra.mxu0 0.0
    %183 = vmatprep.subr.mxu0 0.0
    %184 = vmatpush1.msra.mxu0 0.0
    %185 = vmatprep.subr.mxu0 0.0
    %186 = vmatpush1.msra.mxu0 0.0
    %187 = vmatprep.subr.mxu0 0.0
    %188 = vmatpush1.msra.mxu0 0.0
    %189 = vmatprep.subr.mxu0 0.0
    %190 = vmatpush1.msra.mxu0 0.0
    %191 = vmatprep.mubr.f32.mxu0 0.0
    %192 = vmatmul.mubr.f32.gmra.mrb[0].mxu0 %v125
    %v193 = vpop.f32.mrb[0].mxu0
    %v194 = vadd.f32 %v121, %v193
    %v195 = vpop.f32.mrb[0].mxu0
    %196 = vdwg.mxu0
    %197 = vst.msk [vmem:[#allocation2] sm:$0xff] %vm33, %v194
    // Predicated region
    $region22: #{tpu_custom_call.1} parent=1 // pred_check
      _
    $region23: #{tpu_custom_call.1} parent=1 // pred_check_branch
      %199 = sbr.rel (0) target = $region25
    $region24: #{tpu_custom_call.1} parent=1 // pred_region
      %s201 = ssub.s32 128, 128
      %202 = vsyncadd [#allocation3], %s201
      %s204 = sshll.u32 [#allocation2], 4
      %s205 = int_to_ptr.vmem [resolvable:$true] %s204
      %207 = dma.vmem_to_hbm [thread:$0]  %s205, 128, %s5, [#allocation3]
    $region25: #{tpu_custom_call.1} parent=1 // pred_fallthru
      _
    // Predicated region
    $region26: #{tpu_custom_call.1} parent=1 // pred_check
      _
    $region27: #{tpu_custom_call.1} parent=1 // pred_check_branch
      %209 = sbr.rel (0) target = $region29
    $region28: #{tpu_custom_call.1} parent=1 // pred_region
      %210 = dma.done [#allocation3], 128
    $region29: #{tpu_custom_call.1} parent=1 // pred_fallthru
      _
    %211 = vsyncpa [#allocation3], 1

</llo_original>
